<compile_context>
chip_gen: v6e
topology: v6e:2x2x1
jax: 0.10.0
libtpu: 0.0.40
codegen_flags: <defaults>
</compile_context>

<pallas_src>
import functools

import jax
import jax.numpy as jnp
from jax.experimental import pallas as pl
from jax.experimental.pallas import tpu as pltpu


def _round_up(x, m):
    return ((x + m - 1) // m) * m


def _round_down(x, m):
    return (x // m) * m


def _vmem_capacity_bytes():
    """Physical per-core VMEM in bytes (conservative fallback if unknown)."""
    try:
        info = pltpu.get_tpu_info()
        cap = getattr(info, "vmem_capacity_bytes", None)
        if cap:
            return int(cap)
    except Exception:
        pass
    return 64 * 1024 * 1024  # v7x per-TensorCore VMEM (smallest of v5e/v6e/v7x)


# ----------------------------------------------------------------------------
# Kernels
# ----------------------------------------------------------------------------
def _adain_kernel(x_ref, w_ref, b_ref, o_ref, *, eps, rows_per_block):
    """Single-pass AdaIN: whole H*W row per block.

    x_ref: (rows_per_block, HW);  w_ref/b_ref: full (BC_pad, 1), VMEM-resident.
    """
    i = pl.program_id(0)
    r0 = pl.multiple_of(i * rows_per_block, 8)

    x = x_ref[...].astype(jnp.float32)
    mean = jnp.mean(x, axis=-1, keepdims=True)
    centered = x - mean
    var = jnp.mean(centered * centered, axis=-1, keepdims=True)  # biased var
    inv = jax.lax.rsqrt(var + eps)

    w = w_ref[pl.ds(r0, rows_per_block), :].astype(jnp.float32)
    b = b_ref[pl.ds(r0, rows_per_block), :].astype(jnp.float32)
    o_ref[...] = (centered * (inv * w) + b).astype(o_ref.dtype)


def _stats_kernel(x_ref, sum_ref, sq_ref):
    """Pass 1 of the HW-tiled path: accumulate per-row sum and sum-of-squares."""
    k = pl.program_id(1)

    @pl.when(k == 0)
    def _():
        sum_ref[...] = jnp.zeros_like(sum_ref)
        sq_ref[...] = jnp.zeros_like(sq_ref)

    x = x_ref[...].astype(jnp.float32)
    sum_ref[...] += jnp.sum(x, axis=-1, keepdims=True)
    sq_ref[...] += jnp.sum(x * x, axis=-1, keepdims=True)


def _apply_kernel(x_ref, scale_ref, shift_ref, o_ref):
    """Pass 2 of the HW-tiled path: out = x * scale + shift (per row)."""
    o_ref[...] = (x_ref[...].astype(jnp.float32) * scale_ref[...]
                  + shift_ref[...]).astype(o_ref.dtype)


# ----------------------------------------------------------------------------
# Wrapper
# ----------------------------------------------------------------------------
def adaptive_instance_norm_2d(x, weight, bias, *, eps=1e-5, force_hw_tile=None):
    """AdaIN forward. x: (B, C, H, W); weight, bias: (B*C,). Returns (B, C, H, W).

    force_hw_tile: testing knob to force the HW-tiled two-pass path with the
    given spatial tile size (multiple of 128).
    """
    B, C, H, W = x.shape
    BC, HW = B * C, H * W
    assert weight.shape == (BC,) and bias.shape == (BC,), \
        "weight/bias must have shape (B*C,) as in AdaIN"

    itemsize = jnp.dtype(x.dtype).itemsize
    row_mult = 16 if itemsize < 4 else 8          # bf16 packs 16 sublanes/vreg

    vmem_cap = _vmem_capacity_bytes()
    vmem_limit = (vmem_cap * 3) // 4              # ~48 MiB v7x, ~96 MiB v5e/v6e
    usable = (vmem_limit * 4) // 5                # headroom for compiler scratch

    x2d = x.reshape(BC, HW)
    w2d = weight.reshape(BC, 1).astype(jnp.float32)
    b2d = bias.reshape(BC, 1).astype(jnp.float32)

    bc_min_pad = _round_up(BC, row_mult)
    target_block_bytes = 4 * 1024 * 1024          # past the ~85%-of-roofline knee

    # VMEM bytes needed per row for the single-pass path:
    # input double-buffer + output double-buffer + f32 temporaries in the kernel.
    per_row_single = HW * (4 * itemsize + 8)
    single_pass_ok = (force_hw_tile is None) and \
        (row_mult * per_row_single <= usable)

    if single_pass_ok:
        # ------------------ single-pass path (whole HW row per block) --------
        rows = min(usable // per_row_single,
                   max(row_mult, target_block_bytes // max(1, HW * itemsize)),
                   bc_min_pad)
        rows = max(row_mult, _round_down(rows, row_mult))
        # Keep >= 2 grid steps when possible so v7x's 2 TensorCores both work.
        if rows >= bc_min_pad and bc_min_pad >= 2 * row_mult:
            rows = _round_up(pl.cdiv(bc_min_pad, 2), row_mult)
        rows = min(rows, bc_min_pad)

        BC_pad = _round_up(BC, rows)
        grid = (BC_pad // rows,)

        if BC_pad != BC:
            x2d = jnp.pad(x2d, ((0, BC_pad - BC), (0, 0)))
            w2d = jnp.pad(w2d, ((0, BC_pad - BC), (0, 0)))
            b2d = jnp.pad(b2d, ((0, BC_pad - BC), (0, 0)))

        cost = pl.CostEstimate(
            flops=7 * BC_pad * HW,
            transcendentals=BC_pad,
            bytes_accessed=2 * BC_pad * HW * itemsize + 8 * BC_pad,
        )

        out2d = pl.pallas_call(
            functools.partial(_adain_kernel, eps=eps, rows_per_block=rows),
            out_shape=jax.ShapeDtypeStruct((BC_pad, HW), x.dtype),
            grid_spec=pltpu.PrefetchScalarGridSpec(
                num_scalar_prefetch=0,
                grid=grid,
                in_specs=[
                    pl.BlockSpec((rows, HW), lambda i: (i, 0)),
                    # weight / bias: full extent, constant block index ->
                    # DMA'd once, resident in VMEM across all grid steps.
                    pl.BlockSpec((BC_pad, 1), lambda i: (0, 0)),
                    pl.BlockSpec((BC_pad, 1), lambda i: (0, 0)),
                ],
                out_specs=pl.BlockSpec((rows, HW), lambda i: (i, 0)),
            ),
            compiler_params=pltpu.CompilerParams(
                dimension_semantics=("parallel",),
                vmem_limit_bytes=vmem_limit,
            ),
            cost_estimate=cost,
        )(x2d, w2d, b2d)

        return out2d[:BC].reshape(B, C, H, W)

    # ---------------- HW-tiled two-pass path (large spatial sizes) -----------
    hw_tile = int(force_hw_tile) if force_hw_tile is not None else 2048
    hw_tile = max(128, _round_down(hw_tile, 128))
    hw_tile = min(hw_tile, _round_up(HW, 128))

    per_row_tiled = hw_tile * (4 * itemsize + 8)
    rows = min(usable // per_row_tiled,
               max(row_mult, target_block_bytes // max(1, hw_tile * itemsize)),
               bc_min_pad)
    rows = max(row_mult, _round_down(rows, row_mult))
    rows = min(rows, bc_min_pad)

    BC_pad = _round_up(BC, rows)
    HW_pad = _round_up(HW, hw_tile)
    grid = (BC_pad // rows, HW_pad // hw_tile)

    pad_r, pad_c = BC_pad - BC, HW_pad - HW
    if pad_r or pad_c:
        x2d = jnp.pad(x2d, ((0, pad_r), (0, pad_c)))
    if pad_r:
        w2d = jnp.pad(w2d, ((0, pad_r), (0, 0)))
        b2d = jnp.pad(b2d, ((0, pad_r), (0, 0)))

    stats_cost = pl.CostEstimate(
        flops=3 * BC_pad * HW_pad,
        transcendentals=0,
        bytes_accessed=BC_pad * HW_pad * itemsize + 8 * BC_pad,
    )
    sums, sqs = pl.pallas_call(
        _stats_kernel,
        out_shape=(jax.ShapeDtypeStruct((BC_pad, 1), jnp.float32),
                   jax.ShapeDtypeStruct((BC_pad, 1), jnp.float32)),
        grid_spec=pltpu.PrefetchScalarGridSpec(
            num_scalar_prefetch=0,
            grid=grid,
            in_specs=[pl.BlockSpec((rows, hw_tile), lambda i, k: (i, k))],
            out_specs=(pl.BlockSpec((rows, 1), lambda i, k: (i, 0)),
                       pl.BlockSpec((rows, 1), lambda i, k: (i, 0))),
        ),
        compiler_params=pltpu.CompilerParams(
            dimension_semantics=("parallel", "arbitrary"),
            vmem_limit_bytes=vmem_limit,
        ),
        cost_estimate=stats_cost,
    )(x2d)

    # Fold normalization + affine into one scale/shift per row (O(B*C) JAX work).
    # Zero-padded HW columns contribute 0 to both accumulators, so divide by the
    # true HW.
    mean = sums / HW
    var = jnp.maximum(sqs / HW - mean * mean, 0.0)   # biased variance
    inv = jax.lax.rsqrt(var + eps)
    scale = w2d * inv
    shift = b2d - mean * scale

    apply_cost = pl.CostEstimate(
        flops=2 * BC_pad * HW_pad,
        transcendentals=0,
        bytes_accessed=2 * BC_pad * HW_pad * itemsize + 8 * BC_pad,
    )
    out2d = pl.pallas_call(
        _apply_kernel,
        out_shape=jax.ShapeDtypeStruct((BC_pad, HW_pad), x.dtype),
        grid_spec=pltpu.PrefetchScalarGridSpec(
            num_scalar_prefetch=0,
            grid=grid,
            in_specs=[
                pl.BlockSpec((rows, hw_tile), lambda i, k: (i, k)),
                # scale/shift block index depends only on i -> re-fetched only
                # when the row block changes, not every grid step.
                pl.BlockSpec((rows, 1), lambda i, k: (i, 0)),
                pl.BlockSpec((rows, 1), lambda i, k: (i, 0)),
            ],
            out_specs=pl.BlockSpec((rows, hw_tile), lambda i, k: (i, k)),
        ),
        compiler_params=pltpu.CompilerParams(
            dimension_semantics=("parallel", "parallel"),
            vmem_limit_bytes=vmem_limit,
        ),
        cost_estimate=apply_cost,
    )(x2d, scale, shift)

    return out2d[:BC, :HW].reshape(B, C, H, W)


# ----------------------------------------------------------------------------
# Reference & test
# ----------------------------------------------------------------------------
def _reference(x, weight, bias, eps=1e-5):
    B, C, H, W = x.shape
    xr = x.reshape(B * C, H * W).astype(jnp.float32)
    mean = jnp.mean(xr, axis=-1, keepdims=True)
    var = jnp.mean((xr - mean) ** 2, axis=-1, keepdims=True)
    out = (xr - mean) / jnp.sqrt(var + eps)
    out = out * weight[:, None] + bias[:, None]
    return out.reshape(B, C, H, W).astype(x.dtype)


if __name__ == "__main__":
    B, C, H, W = 2, 4, 16, 16
    key = jax.random.PRNGKey(0)
    kx, kw, kb = jax.random.split(key, 3)

    x = jax.random.normal(kx, (B, C, H, W), dtype=jnp.float32)
    # AdaIN weight/bias are assigned externally per (batch*channel) instance.
    weight = jax.random.normal(kw, (B * C,), dtype=jnp.float32) * 0.5 + 1.0
    bias = jax.random.normal(kb, (B * C,), dtype=jnp.float32) * 0.1

    ref = _reference(x, weight, bias, eps=1e-5)

    # Single-pass path (default for these shapes).
    out = adaptive_instance_norm_2d(x, weight, bias, eps=1e-5)
    out = jax.block_until_ready(out)
    assert out.shape == (B, C, H, W)
    assert jnp.allclose(out, ref, atol=1e-4, rtol=1e-4), "single-pass mismatch"

    # Also exercise the HW-tiled two-pass path (used for very large images).
    out_tiled = adaptive_instance_norm_2d(x, weight, bias, eps=1e-5,
                                          force_hw_tile=128)
    out_tiled = jax.block_until_ready(out_tiled)
    assert jnp.allclose(out_tiled, ref, atol=1e-4, rtol=1e-4), "tiled mismatch"

    print("KERNEL_OK")
</pallas_src>

<mosaic_0001>
module attributes {stable_mosaic.version = 11 : i64} {
  func.func @_adain_kernel(%arg0: i32, %arg1: memref<8x256xf32, #tpu.memory_space<vmem>>, %arg2: memref<8x1xf32, #tpu.memory_space<vmem>>, %arg3: memref<8x1xf32, #tpu.memory_space<vmem>>, %arg4: memref<8x256xf32, #tpu.memory_space<vmem>>) attributes {dimension_semantics = [#tpu.dimension_semantics<parallel>], iteration_bounds = array<i64: 1>, scalar_prefetch = 0 : i64, scratch_operands = 0 : i64, tpu.core_type = #tpu.core_type<tc>, window_params = [{transform_indices = @transform_0, window_bounds = array<i64: 8, 256>}, {pipeline_mode = #tpu.pipeline_mode<synchronous>, transform_indices = @transform_1, window_bounds = array<i64: 8, 1>}, {pipeline_mode = #tpu.pipeline_mode<synchronous>, transform_indices = @transform_2, window_bounds = array<i64: 8, 1>}, {transform_indices = @transform_3, window_bounds = array<i64: 8, 256>}]} {
    %c8_i32 = arith.constant 8 : i32
    %0 = arith.muli %arg0, %c8_i32 : i32
    %1 = tpu.assume_multiple %0, 8 : i32
    %c0 = arith.constant 0 : index
    %c0_0 = arith.constant 0 : index
    %2 = vector.load %arg1[%c0, %c0_0] : memref<8x256xf32, #tpu.memory_space<vmem>>, vector<8x256xf32>
    %cst = arith.constant dense<0.000000e+00> : vector<8xf32>
    %3 = vector.multi_reduction <add>, %2, %cst [1] : vector<8x256xf32> to vector<8xf32>
    %4 = vector.shape_cast %3 : vector<8xf32> to vector<8x1xf32>
    %cst_1 = arith.constant 2.560000e+02 : f32
    %5 = vector.broadcast %cst_1 : f32 to vector<8x1xf32>
    %6 = arith.divf %4, %5 : vector<8x1xf32>
    %7 = vector.broadcast %6 : vector<8x1xf32> to vector<8x256xf32>
    %8 = arith.subf %2, %7 : vector<8x256xf32>
    %9 = arith.mulf %8, %8 : vector<8x256xf32>
    %cst_2 = arith.constant dense<0.000000e+00> : vector<8xf32>
    %10 = vector.multi_reduction <add>, %9, %cst_2 [1] : vector<8x256xf32> to vector<8xf32>
    %11 = vector.shape_cast %10 : vector<8xf32> to vector<8x1xf32>
    %cst_3 = arith.constant 2.560000e+02 : f32
    %12 = vector.broadcast %cst_3 : f32 to vector<8x1xf32>
    %13 = arith.divf %11, %12 : vector<8x1xf32>
    %cst_4 = arith.constant 9.99999974E-6 : f32
    %14 = vector.broadcast %cst_4 : f32 to vector<8x1xf32>
    %15 = arith.addf %13, %14 : vector<8x1xf32>
    %16 = math.rsqrt %15 : vector<8x1xf32>
    %17 = arith.index_cast %1 : i32 to index
    %c0_5 = arith.constant 0 : index
    %18 = vector.load %arg2[%17, %c0_5] : memref<8x1xf32, #tpu.memory_space<vmem>>, vector<8x1xf32>
    %19 = arith.index_cast %1 : i32 to index
    %c0_6 = arith.constant 0 : index
    %20 = vector.load %arg3[%19, %c0_6] : memref<8x1xf32, #tpu.memory_space<vmem>>, vector<8x1xf32>
    %21 = arith.mulf %16, %18 : vector<8x1xf32>
    %22 = vector.broadcast %21 : vector<8x1xf32> to vector<8x256xf32>
    %23 = arith.mulf %8, %22 : vector<8x256xf32>
    %24 = vector.broadcast %20 : vector<8x1xf32> to vector<8x256xf32>
    %25 = arith.addf %23, %24 : vector<8x256xf32>
    %c0_7 = arith.constant 0 : index
    %c0_8 = arith.constant 0 : index
    %26 = vector.load %arg4[%c0_7, %c0_8] : memref<8x256xf32, #tpu.memory_space<vmem>>, vector<8x256xf32>
    tpu.vector_store %arg4[%c0_7, %c0_8], %25 {strides = array<i32>} : memref<8x256xf32, #tpu.memory_space<vmem>>, vector<8x256xf32>,
    return
  }
  func.func @transform_0(%arg0: i32) -> (i32, i32) {
    %c0_i32 = arith.constant 0 : i32
    %c0_i32_0 = arith.constant 0 : i32
    return %arg0, %c0_i32 : i32, i32
  }
  func.func @transform_1(%arg0: i32) -> (i32, i32) {
    %c0_i32 = arith.constant 0 : i32
    %c0_i32_0 = arith.constant 0 : i32
    %c0_i32_1 = arith.constant 0 : i32
    return %c0_i32, %c0_i32_0 : i32, i32
  }
  func.func @transform_2(%arg0: i32) -> (i32, i32) {
    %c0_i32 = arith.constant 0 : i32
    %c0_i32_0 = arith.constant 0 : i32
    %c0_i32_1 = arith.constant 0 : i32
    return %c0_i32, %c0_i32_0 : i32, i32
  }
  func.func @transform_3(%arg0: i32) -> (i32, i32) {
    %c0_i32 = arith.constant 0 : i32
    %c0_i32_0 = arith.constant 0 : i32
    return %arg0, %c0_i32 : i32, i32
  }
}

</mosaic_0001>

<llo_original>
// kernel: tpu_custom_call.1
$region0: #{tpu_custom_call.1}
  #allocation0 [shape = 'u32[]', space=smem, size = 0x4, offset = 0x4, fixed_abs, tag = 'smem constant byte address 0x4 - core index']
  #allocation1 [shape = 'u32[144,128]{1,0:T(1,128)}', space=vmem, size = 0x12000, scoped, tag = 'internal scratch']
  %s0 = inlined_call_operand.vmem [shape: f32[8,256], index: 0, kind: input, shape index: {}]
  %s1 = inlined_call_operand.vmem [shape: f32[8,1], index: 1, kind: input, shape index: {}]
  %s2 = inlined_call_operand.vmem [shape: f32[8,1], index: 2, kind: input, shape index: {}]
  %s3 = inlined_call_operand.hbm [shape: f32[8,256], index: 3, kind: output, shape index: {}]
  %s4 = sld [smem:[#allocation0]]
  $region22: #{tpu_custom_call.1} parent=0
    _
  %s6 = ssub.s32 1, %s4
  %s7 = scalar_select 0, %s6, %s4
  $region1: #{tpu_custom_call.1} parent=0
    #allocation2 [shape = 'u8[8192]{0}', space=vmem, size = 0x2000, scoped, tag = 'output window, operand 0, single buffered']
    #allocation3 [shape = 's32[1]{0}', space=sflag, size = 0x4, scoped, tag = 'scoped memory for tpu_custom_call.1']
    %8 = vsyncpa [#allocation3], 0
    // Predicated region
    $region2: #{tpu_custom_call.1} parent=1 // pred_check
      _
    $region3: #{tpu_custom_call.1} parent=1 // pred_check_branch
      %10 = sbr.rel (0) target = $region5
    $region4: #{tpu_custom_call.1} parent=1 // pred_region
      _
    $region5: #{tpu_custom_call.1} parent=1 // pred_fallthru
      _
    // Predicated region
    $region6: #{tpu_custom_call.1} parent=1 // pred_check
      _
    $region7: #{tpu_custom_call.1} parent=1 // pred_check_branch
      %12 = sbr.rel (0) target = $region9
    $region8: #{tpu_custom_call.1} parent=1 // pred_region
      _
    $region9: #{tpu_custom_call.1} parent=1 // pred_fallthru
      _
    // Predicated region
    $region10: #{tpu_custom_call.1} parent=1 // pred_check
      _
    $region11: #{tpu_custom_call.1} parent=1 // pred_check_branch
      %14 = sbr.rel (0) target = $region13
    $region12: #{tpu_custom_call.1} parent=1 // pred_region
      _
    $region13: #{tpu_custom_call.1} parent=1 // pred_fallthru
      _
    %s15 = smul.u32 0, 8
    %v16 = vld [vmem:[%s0] sm:$0xff]
    %v17 = vld [vmem:[%s0 + $0x8] sm:$0xff]
    %v18 = vadd.f32 %v16, %v17
    %19 = vadd.xlane.f32.xlu0 %v18
    %v20 = vpop.xlane.xlu0 %19
    %v21 = vrcp.pop 256.0
    %v22 = vmul.f32 %v20, %v21
    %v23 = vsub.f32 %v16, %v22
    %v24 = vsub.f32 %v17, %v22
    %v25 = vmul.f32 %v23, %v23
    %v26 = vmul.f32 %v24, %v24
    %v27 = vadd.f32 %v25, %v26
    %28 = vadd.xlane.f32.xlu0 %v27
    %v29 = vpop.xlane.xlu0 %28
    %v30 = vmul.f32 %v29, %v21
    %v31 = vadd.f32 %v30, 1e-05
    %v32 = vrsqrt.pop %v31
    %s33 = scalar_lea.vmem %s1, %s15
    %v34 = vld [vmem:[%s33] sm:$0xff]
    %s35 = scalar_lea.vmem %s2, %s15
    %v36 = vld [vmem:[%s35] sm:$0xff]
    %v37 = vmul.f32 %v32, %v34
    %39 = vset.pattern.permute.xlu0 0
    %40 = vperm.xlu0 %39, %v37
    %v41 = vpop.permute.xlu0 %40
    %v43 = vmul.f32 %v23, %v41
    %v44 = vmul.f32 %v24, %v41
    %46 = vset.pattern.permute.xlu0 0
    %47 = vperm.xlu0 %46, %v36
    %v48 = vpop.permute.xlu0 %47
    %v50 = vadd.f32 %v43, %v48
    %v51 = vadd.f32 %v44, %v48
    %52 = vst [vmem:[#allocation2] sm:$0xff] %v50
    %53 = vst [vmem:[#allocation2 + $0x8] sm:$0xff] %v51
    // Predicated region
    $region14: #{tpu_custom_call.1} parent=1 // pred_check
      _
    $region15: #{tpu_custom_call.1} parent=1 // pred_check_branch
      %55 = sbr.rel (0) target = $region17
    $region16: #{tpu_custom_call.1} parent=1 // pred_region
      %s57 = ssub.s32 256, 256
      %58 = vsyncadd [#allocation3], %s57
      %s60 = sshll.u32 [#allocation2], 4
      %s61 = int_to_ptr.vmem [resolvable:$true] %s60
      %63 = dma.vmem_to_hbm [thread:$0]  %s61, 256, %s3, [#allocation3]
    $region17: #{tpu_custom_call.1} parent=1 // pred_fallthru
      _
    // Predicated region
    $region18: #{tpu_custom_call.1} parent=1 // pred_check
      _
    $region19: #{tpu_custom_call.1} parent=1 // pred_check_branch
      %65 = sbr.rel (0) target = $region21
    $region20: #{tpu_custom_call.1} parent=1 // pred_region
      %66 = dma.done [#allocation3], 256
    $region21: #{tpu_custom_call.1} parent=1 // pred_fallthru
      _
    %67 = vsyncpa [#allocation3], 1

</llo_original>
